<compile_context>
chip_gen: v6e
topology: v6e:2x2x1
jax: 0.10.0
libtpu: 0.0.40
codegen_flags: <defaults>
</compile_context>

<pallas_src>
import functools

import jax
import jax.numpy as jnp
from jax.experimental import pallas as pl
from jax.experimental.pallas import tpu as pltpu


# ----------------------------- Pallas kernel --------------------------------
def gated_sae_kernel(h_ref, wg_ref, wd_ref, bg_ref, bm_ref, rm_ref, bd_ref,
                     seg_in_ref, seg_sae_ref,
                     loss_ref, acts_ref, hrec_ref,
                     *, sparsity_coeff, inv_d_in):
    h      = h_ref[...]        # (TB, n_inst*d_in)
    b_dec  = bd_ref[...]       # (1,  n_inst*d_in)
    b_gate = bg_ref[...]       # (1,  n_inst*d_sae)

    h_cent = h - b_dec                                                    # (TB, DIT)

    # ---- encoder: single lane-packed (block-diagonal) matmul for all instances
    gate_pre = jnp.dot(h_cent, wg_ref[...],
                       preferred_element_type=jnp.float32) + b_gate       # (TB, DST)
    gate_post = jnp.maximum(gate_pre, 0.0)

    # ---- magnitude path WITHOUT a second encoder matmul:
    #      h_cent @ (exp(r_mag) * W_gate) == (gate_pre - b_gate) * exp(r_mag)
    mag_pre = (gate_pre - b_gate) * jnp.exp(rm_ref[...]) + bm_ref[...]    # (TB, DST)
    acts_post = jnp.where(gate_pre > 0.0, jnp.maximum(mag_pre, 0.0), 0.0)

    # ---- fused decoder: one matmul serves both reconstruction paths
    stacked = jnp.concatenate([acts_post, gate_post], axis=0)             # (2TB, DST)
    recon2 = jnp.dot(stacked, wd_ref[...],
                     preferred_element_type=jnp.float32)                  # (2TB, DIT)
    tb = h.shape[0]
    rec_nb = recon2[:tb]        # acts_post @ W_dec   (b_dec not yet added)
    via_nb = recon2[tb:]        # gate_post @ W_dec   (b_dec not yet added)

    # ---- losses;   (x @ W_dec + b_dec) - h  ==  x @ W_dec - h_cent
    err_rec = rec_nb - h_cent
    err_aux = via_nb - h_cent
    seg_in  = seg_in_ref[...]                                             # (DIT, n_inst)
    seg_sae = seg_sae_ref[...]                                            # (DST, n_inst)
    l_rec = jnp.dot(err_rec * err_rec, seg_in,
                    preferred_element_type=jnp.float32) * inv_d_in        # (TB, n_inst)
    l_aux = jnp.dot(err_aux * err_aux, seg_in,
                    preferred_element_type=jnp.float32)                   # (TB, n_inst)
    l_sp  = jnp.dot(gate_post, seg_sae,
                    preferred_element_type=jnp.float32)                   # (TB, n_inst)
    total = l_rec + sparsity_coeff * l_sp + l_aux

    # single packed loss output instead of four (TB, 1) streams
    loss_ref[0] = l_rec
    loss_ref[1] = l_sp
    loss_ref[2] = l_aux
    loss_ref[3] = total
    acts_ref[...] = acts_post
    hrec_ref[...] = rec_nb + b_dec


# ------------------------------ wrapper --------------------------------------
def gated_sae_forward(h, W_gate, W_dec, b_gate, b_mag, r_mag, b_dec,
                      sparsity_coeff=0.2, batch_tile=512):
    """h: (batch, n_inst, d_in) float32, matching the PyTorch module layout."""
    B, n_inst, d_in = h.shape
    d_sae = W_gate.shape[-1]
    DIT = n_inst * d_in
    DST = n_inst * d_sae

    # --- weight-side layout plumbing (tiny tensors, one-time cost):
    #     block-diagonal packing folds the instance dim into the lane dim so a
    #     single MXU pass handles all instances.
    eye = jnp.eye(n_inst, dtype=jnp.float32)
    Wg_bd = jnp.einsum("nm,nds->ndms", eye, W_gate).reshape(DIT, DST)   # (DIT, DST)
    Wd_bd = jnp.einsum("nm,nsd->nsmd", eye, W_dec).reshape(DST, DIT)    # (DST, DIT)
    seg_in  = jnp.repeat(eye, d_in,  axis=0)                            # (DIT, n_inst)
    seg_sae = jnp.repeat(eye, d_sae, axis=0)                            # (DST, n_inst)

    # activations: contiguous reshapes only (no transposes / extra HBM passes)
    h2  = h.reshape(B, DIT)
    bg2 = b_gate.reshape(1, DST)
    bm2 = b_mag.reshape(1, DST)
    rm2 = r_mag.reshape(1, DST)
    bd2 = b_dec.reshape(1, DIT)

    tb = B if B <= batch_tile else batch_tile
    assert B % tb == 0, "batch must be divisible by the batch tile"
    n_bt = B // tb

    kern = functools.partial(gated_sae_kernel,
                             sparsity_coeff=float(sparsity_coeff),
                             inv_d_in=1.0 / d_in)

    out_shapes = (
        jax.ShapeDtypeStruct((4, B, n_inst), jnp.float32),   # packed losses
        jax.ShapeDtypeStruct((B, DST), jnp.float32),         # acts_post (flat)
        jax.ShapeDtypeStruct((B, DIT), jnp.float32),         # h_reconstructed (flat)
    )

    grid_spec = pltpu.PrefetchScalarGridSpec(
        num_scalar_prefetch=0,
        grid=(n_bt,),
        in_specs=[
            pl.BlockSpec((tb, DIT),       lambda b: (b, 0)),   # h  (streams over batch)
            pl.BlockSpec((DIT, DST),      lambda b: (0, 0)),   # W_gate (block-diag, resident)
            pl.BlockSpec((DST, DIT),      lambda b: (0, 0)),   # W_dec  (block-diag, resident)
            pl.BlockSpec((1, DST),        lambda b: (0, 0)),   # b_gate
            pl.BlockSpec((1, DST),        lambda b: (0, 0)),   # b_mag
            pl.BlockSpec((1, DST),        lambda b: (0, 0)),   # r_mag
            pl.BlockSpec((1, DIT),        lambda b: (0, 0)),   # b_dec
            pl.BlockSpec((DIT, n_inst),   lambda b: (0, 0)),   # seg_in
            pl.BlockSpec((DST, n_inst),   lambda b: (0, 0)),   # seg_sae
        ],
        out_specs=[
            pl.BlockSpec((4, tb, n_inst), lambda b: (0, b, 0)),
            pl.BlockSpec((tb, DST),       lambda b: (b, 0)),
            pl.BlockSpec((tb, DIT),       lambda b: (b, 0)),
        ],
    )

    loss_pack, acts_flat, hrec_flat = pl.pallas_call(
        kern,
        out_shape=out_shapes,
        grid_spec=grid_spec,
        compiler_params=pltpu.CompilerParams(
            dimension_semantics=("parallel",)),   # batch tiles independent (v7x: 2 TCs)
    )(h2, Wg_bd, Wd_bd, bg2, bm2, rm2, bd2, seg_in, seg_sae)

    loss_dict = {
        "L_reconstruction": loss_pack[0],   # (B, n_inst)
        "L_sparsity":       loss_pack[1],
        "L_aux":            loss_pack[2],
    }
    loss_out  = loss_pack[3]
    acts_post = acts_flat.reshape(B, n_inst, d_sae)
    h_recon   = hrec_flat.reshape(B, n_inst, d_in)
    return loss_dict, loss_out, acts_post, h_recon


# ------------------------ pure-JAX reference ----------------------------------
def gated_sae_forward_ref(h, W_gate, W_dec, b_gate, b_mag, r_mag, b_dec,
                          sparsity_coeff=0.2):
    h_cent = h - b_dec[None]
    gate_pre = jnp.einsum("bid,ids->bis", h_cent, W_gate) + b_gate[None]
    active = (gate_pre > 0).astype(jnp.float32)
    W_mag = jnp.exp(r_mag)[:, None, :] * W_gate
    mag_pre = jnp.einsum("bid,ids->bis", h_cent, W_mag) + b_mag[None]
    feature_mag = jax.nn.relu(mag_pre)
    acts_post = active * feature_mag
    h_recon = jnp.einsum("bis,isd->bid", acts_post, W_dec) + b_dec[None]
    gate_post = jax.nn.relu(gate_pre)
    via_gate = jnp.einsum("bis,isd->bid", gate_post, W_dec) + b_dec[None]
    l_rec = jnp.mean((h_recon - h) ** 2, axis=-1)
    l_sp = jnp.sum(gate_post, axis=-1)
    l_aux = jnp.sum((via_gate - h) ** 2, axis=-1)
    loss = l_rec + sparsity_coeff * l_sp + l_aux
    return {"L_reconstruction": l_rec, "L_sparsity": l_sp, "L_aux": l_aux}, \
           loss, acts_post, h_recon


# --------------------------------- main ---------------------------------------
if __name__ == "__main__":
    # small config consistent with ToySAEConfig(n_inst, d_in, d_sae)
    n_inst, d_in, d_sae, batch = 4, 16, 32, 64
    sparsity_coeff = 0.2

    key = jax.random.PRNGKey(0)
    k_h, k_wg, k_wd, k_bg, k_bm, k_rm, k_bd = jax.random.split(key, 7)

    # deterministic parameter init (kaiming-uniform-like for weights)
    bound_g = (6.0 / d_in) ** 0.5
    bound_d = (6.0 / d_sae) ** 0.5
    W_gate = jax.random.uniform(k_wg, (n_inst, d_in, d_sae), jnp.float32,
                                -bound_g, bound_g)
    W_dec = jax.random.uniform(k_wd, (n_inst, d_sae, d_in), jnp.float32,
                               -bound_d, bound_d)
    # biases are zeros in __init__; use small random values to exercise the path
    b_gate = 0.1 * jax.random.normal(k_bg, (n_inst, d_sae), jnp.float32)
    b_mag = 0.1 * jax.random.normal(k_bm, (n_inst, d_sae), jnp.float32)
    r_mag = 0.1 * jax.random.normal(k_rm, (n_inst, d_sae), jnp.float32)
    b_dec = 0.1 * jax.random.normal(k_bd, (n_inst, d_in), jnp.float32)

    h = jax.random.normal(k_h, (batch, n_inst, d_in), jnp.float32)

    ld, loss, acts, h_rec = gated_sae_forward(
        h, W_gate, W_dec, b_gate, b_mag, r_mag, b_dec, sparsity_coeff)
    jax.block_until_ready((loss, acts, h_rec))

    ld_r, loss_r, acts_r, h_rec_r = gated_sae_forward_ref(
        h, W_gate, W_dec, b_gate, b_mag, r_mag, b_dec, sparsity_coeff)

    for k in ("L_reconstruction", "L_sparsity", "L_aux"):
        assert jnp.allclose(ld[k], ld_r[k], atol=1e-4, rtol=1e-4), k
    assert jnp.allclose(loss, loss_r, atol=1e-4, rtol=1e-4)
    assert jnp.allclose(acts, acts_r, atol=1e-4, rtol=1e-4)
    assert jnp.allclose(h_rec, h_rec_r, atol=1e-4, rtol=1e-4)

    print("KERNEL_OK")
</pallas_src>

<mosaic_0001>
module attributes {stable_mosaic.version = 11 : i64} {
  func.func @gated_sae_kernel(%arg0: i32, %arg1: memref<64x64xf32, #tpu.memory_space<vmem>>, %arg2: memref<64x128xf32, #tpu.memory_space<vmem>>, %arg3: memref<128x64xf32, #tpu.memory_space<vmem>>, %arg4: memref<1x128xf32, #tpu.memory_space<vmem>>, %arg5: memref<1x128xf32, #tpu.memory_space<vmem>>, %arg6: memref<1x128xf32, #tpu.memory_space<vmem>>, %arg7: memref<1x64xf32, #tpu.memory_space<vmem>>, %arg8: memref<64x4xf32, #tpu.memory_space<vmem>>, %arg9: memref<128x4xf32, #tpu.memory_space<vmem>>, %arg10: memref<4x64x4xf32, #tpu.memory_space<vmem>>, %arg11: memref<64x128xf32, #tpu.memory_space<vmem>>, %arg12: memref<64x64xf32, #tpu.memory_space<vmem>>) attributes {dimension_semantics = [#tpu.dimension_semantics<parallel>], iteration_bounds = array<i64: 1>, scalar_prefetch = 0 : i64, scratch_operands = 0 : i64, tpu.core_type = #tpu.core_type<tc>, window_params = [{transform_indices = @transform_0, window_bounds = array<i64: 64, 64>}, {pipeline_mode = #tpu.pipeline_mode<synchronous>, transform_indices = @transform_1, window_bounds = array<i64: 64, 128>}, {pipeline_mode = #tpu.pipeline_mode<synchronous>, transform_indices = @transform_2, window_bounds = array<i64: 128, 64>}, {pipeline_mode = #tpu.pipeline_mode<synchronous>, transform_indices = @transform_3, window_bounds = array<i64: 1, 128>}, {pipeline_mode = #tpu.pipeline_mode<synchronous>, transform_indices = @transform_4, window_bounds = array<i64: 1, 128>}, {pipeline_mode = #tpu.pipeline_mode<synchronous>, transform_indices = @transform_5, window_bounds = array<i64: 1, 128>}, {pipeline_mode = #tpu.pipeline_mode<synchronous>, transform_indices = @transform_6, window_bounds = array<i64: 1, 64>}, {pipeline_mode = #tpu.pipeline_mode<synchronous>, transform_indices = @transform_7, window_bounds = array<i64: 64, 4>}, {pipeline_mode = #tpu.pipeline_mode<synchronous>, transform_indices = @transform_8, window_bounds = array<i64: 128, 4>}, {transform_indices = @transform_9, window_bounds = array<i64: 4, 64, 4>}, {transform_indices = @transform_10, window_bounds = array<i64: 64, 128>}, {transform_indices = @transform_11, window_bounds = array<i64: 64, 64>}]} {
    %c0 = arith.constant 0 : index
    %c0_0 = arith.constant 0 : index
    %0 = vector.load %arg1[%c0, %c0_0] : memref<64x64xf32, #tpu.memory_space<vmem>>, vector<64x64xf32>
    %c0_1 = arith.constant 0 : index
    %c0_2 = arith.constant 0 : index
    %1 = vector.load %arg7[%c0_1, %c0_2] : memref<1x64xf32, #tpu.memory_space<vmem>>, vector<1x64xf32>
    %c0_3 = arith.constant 0 : index
    %c0_4 = arith.constant 0 : index
    %2 = vector.load %arg4[%c0_3, %c0_4] : memref<1x128xf32, #tpu.memory_space<vmem>>, vector<1x128xf32>
    %3 = vector.broadcast %1 : vector<1x64xf32> to vector<64x64xf32>
    %4 = arith.subf %0, %3 : vector<64x64xf32>
    %c0_5 = arith.constant 0 : index
    %c0_6 = arith.constant 0 : index
    %5 = vector.load %arg2[%c0_5, %c0_6] : memref<64x128xf32, #tpu.memory_space<vmem>>, vector<64x128xf32>
    %cst = arith.constant dense<0.000000e+00> : vector<64x128xf32>
    %6 = tpu.matmul %4, %5, %cst {dimension_numbers = #tpu.dot_dimension_numbers<[1], [0], [0], [1], [0, 0, 1, 1], [], []>} : vector<64x64xf32>, vector<64x128xf32>, vector<64x128xf32> -> vector<64x128xf32>
    %7 = vector.broadcast %2 : vector<1x128xf32> to vector<64x128xf32>
    %8 = arith.addf %6, %7 : vector<64x128xf32>
    %cst_7 = arith.constant 0.000000e+00 : f32
    %9 = vector.broadcast %cst_7 : f32 to vector<64x128xf32>
    %10 = arith.maximumf %8, %9 : vector<64x128xf32>
    %11 = vector.broadcast %2 : vector<1x128xf32> to vector<64x128xf32>
    %12 = arith.subf %8, %11 : vector<64x128xf32>
    %c0_8 = arith.constant 0 : index
    %c0_9 = arith.constant 0 : index
    %13 = vector.load %arg6[%c0_8, %c0_9] : memref<1x128xf32, #tpu.memory_space<vmem>>, vector<1x128xf32>
    %14 = math.exp %13 : vector<1x128xf32>
    %15 = vector.broadcast %14 : vector<1x128xf32> to vector<64x128xf32>
    %16 = arith.mulf %12, %15 : vector<64x128xf32>
    %c0_10 = arith.constant 0 : index
    %c0_11 = arith.constant 0 : index
    %17 = vector.load %arg5[%c0_10, %c0_11] : memref<1x128xf32, #tpu.memory_space<vmem>>, vector<1x128xf32>
    %18 = vector.broadcast %17 : vector<1x128xf32> to vector<64x128xf32>
    %19 = arith.addf %16, %18 : vector<64x128xf32>
    %cst_12 = arith.constant 0.000000e+00 : f32
    %20 = vector.broadcast %cst_12 : f32 to vector<64x128xf32>
    %21 = arith.cmpf ogt, %8, %20 : vector<64x128xf32>
    %cst_13 = arith.constant 0.000000e+00 : f32
    %22 = vector.broadcast %cst_13 : f32 to vector<64x128xf32>
    %23 = arith.maximumf %19, %22 : vector<64x128xf32>
    %cst_14 = arith.constant 0.000000e+00 : f32
    %24 = vector.broadcast %cst_14 : f32 to vector<64x128xf32>
    %25 = arith.select %21, %23, %24 : vector<64x128xi1>, vector<64x128xf32>
    %26 = tpu.concatenate %25, %10 in 0 : vector<64x128xf32>, vector<64x128xf32> -> vector<128x128xf32>
    %c0_15 = arith.constant 0 : index
    %c0_16 = arith.constant 0 : index
    %27 = vector.load %arg3[%c0_15, %c0_16] : memref<128x64xf32, #tpu.memory_space<vmem>>, vector<128x64xf32>
    %cst_17 = arith.constant dense<0.000000e+00> : vector<128x64xf32>
    %28 = tpu.matmul %26, %27, %cst_17 {dimension_numbers = #tpu.dot_dimension_numbers<[1], [0], [0], [1], [0, 0, 1, 1], [], []>} : vector<128x128xf32>, vector<128x64xf32>, vector<128x64xf32> -> vector<128x64xf32>
    %29 = vector.extract_strided_slice %28 {offsets = [0, 0], sizes = [64, 64], strides = [1, 1]} : vector<128x64xf32> to vector<64x64xf32>
    %30 = vector.extract_strided_slice %28 {offsets = [64, 0], sizes = [64, 64], strides = [1, 1]} : vector<128x64xf32> to vector<64x64xf32>
    %31 = arith.subf %29, %4 : vector<64x64xf32>
    %32 = arith.subf %30, %4 : vector<64x64xf32>
    %c0_18 = arith.constant 0 : index
    %c0_19 = arith.constant 0 : index
    %33 = vector.load %arg8[%c0_18, %c0_19] : memref<64x4xf32, #tpu.memory_space<vmem>>, vector<64x4xf32>
    %c0_20 = arith.constant 0 : index
    %c0_21 = arith.constant 0 : index
    %34 = vector.load %arg9[%c0_20, %c0_21] : memref<128x4xf32, #tpu.memory_space<vmem>>, vector<128x4xf32>
    %35 = arith.mulf %31, %31 : vector<64x64xf32>
    %cst_22 = arith.constant dense<0.000000e+00> : vector<64x4xf32>
    %36 = tpu.matmul %35, %33, %cst_22 {dimension_numbers = #tpu.dot_dimension_numbers<[1], [0], [0], [1], [0, 0, 1, 1], [], []>} : vector<64x64xf32>, vector<64x4xf32>, vector<64x4xf32> -> vector<64x4xf32>
    %cst_23 = arith.constant 6.250000e-02 : f32
    %37 = vector.broadcast %cst_23 : f32 to vector<64x4xf32>
    %38 = arith.mulf %36, %37 : vector<64x4xf32>
    %39 = arith.mulf %32, %32 : vector<64x64xf32>
    %cst_24 = arith.constant dense<0.000000e+00> : vector<64x4xf32>
    %40 = tpu.matmul %39, %33, %cst_24 {dimension_numbers = #tpu.dot_dimension_numbers<[1], [0], [0], [1], [0, 0, 1, 1], [], []>} : vector<64x64xf32>, vector<64x4xf32>, vector<64x4xf32> -> vector<64x4xf32>
    %cst_25 = arith.constant dense<0.000000e+00> : vector<64x4xf32>
    %41 = tpu.matmul %10, %34, %cst_25 {dimension_numbers = #tpu.dot_dimension_numbers<[1], [0], [0], [1], [0, 0, 1, 1], [], []>} : vector<64x128xf32>, vector<128x4xf32>, vector<64x4xf32> -> vector<64x4xf32>
    %cst_26 = arith.constant 2.000000e-01 : f32
    %42 = vector.broadcast %cst_26 : f32 to vector<64x4xf32>
    %43 = arith.mulf %42, %41 : vector<64x4xf32>
    %44 = arith.addf %38, %43 : vector<64x4xf32>
    %45 = arith.addf %44, %40 : vector<64x4xf32>
    %c0_27 = arith.constant 0 : index
    %c0_28 = arith.constant 0 : index
    %c0_29 = arith.constant 0 : index
    %46 = vector.load %arg10[%c0_27, %c0_28, %c0_29] : memref<4x64x4xf32, #tpu.memory_space<vmem>>, vector<1x64x4xf32>
    %47 = vector.shape_cast %46 : vector<1x64x4xf32> to vector<64x4xf32>
    %48 = vector.shape_cast %38 : vector<64x4xf32> to vector<1x64x4xf32>
    tpu.vector_store %arg10[%c0_27, %c0_28, %c0_29], %48 {strides = array<i32>} : memref<4x64x4xf32, #tpu.memory_space<vmem>>, vector<1x64x4xf32>,
    %c1 = arith.constant 1 : index
    %c0_30 = arith.constant 0 : index
    %c0_31 = arith.constant 0 : index
    %49 = vector.load %arg10[%c1, %c0_30, %c0_31] : memref<4x64x4xf32, #tpu.memory_space<vmem>>, vector<1x64x4xf32>
    %50 = vector.shape_cast %49 : vector<1x64x4xf32> to vector<64x4xf32>
    %51 = vector.shape_cast %41 : vector<64x4xf32> to vector<1x64x4xf32>
    tpu.vector_store %arg10[%c1, %c0_30, %c0_31], %51 {strides = array<i32>} : memref<4x64x4xf32, #tpu.memory_space<vmem>>, vector<1x64x4xf32>,
    %c2 = arith.constant 2 : index
    %c0_32 = arith.constant 0 : index
    %c0_33 = arith.constant 0 : index
    %52 = vector.load %arg10[%c2, %c0_32, %c0_33] : memref<4x64x4xf32, #tpu.memory_space<vmem>>, vector<1x64x4xf32>
    %53 = vector.shape_cast %52 : vector<1x64x4xf32> to vector<64x4xf32>
    %54 = vector.shape_cast %40 : vector<64x4xf32> to vector<1x64x4xf32>
    tpu.vector_store %arg10[%c2, %c0_32, %c0_33], %54 {strides = array<i32>} : memref<4x64x4xf32, #tpu.memory_space<vmem>>, vector<1x64x4xf32>,
    %c3 = arith.constant 3 : index
    %c0_34 = arith.constant 0 : index
    %c0_35 = arith.constant 0 : index
    %55 = vector.load %arg10[%c3, %c0_34, %c0_35] : memref<4x64x4xf32, #tpu.memory_space<vmem>>, vector<1x64x4xf32>
    %56 = vector.shape_cast %55 : vector<1x64x4xf32> to vector<64x4xf32>
    %57 = vector.shape_cast %45 : vector<64x4xf32> to vector<1x64x4xf32>
    tpu.vector_store %arg10[%c3, %c0_34, %c0_35], %57 {strides = array<i32>} : memref<4x64x4xf32, #tpu.memory_space<vmem>>, vector<1x64x4xf32>,
    %c0_36 = arith.constant 0 : index
    %c0_37 = arith.constant 0 : index
    %58 = vector.load %arg11[%c0_36, %c0_37] : memref<64x128xf32, #tpu.memory_space<vmem>>, vector<64x128xf32>
    tpu.vector_store %arg11[%c0_36, %c0_37], %25 {strides = array<i32>} : memref<64x128xf32, #tpu.memory_space<vmem>>, vector<64x128xf32>,
    %59 = vector.broadcast %1 : vector<1x64xf32> to vector<64x64xf32>
    %60 = arith.addf %29, %59 : vector<64x64xf32>
    %c0_38 = arith.constant 0 : index
    %c0_39 = arith.constant 0 : index
    %61 = vector.load %arg12[%c0_38, %c0_39] : memref<64x64xf32, #tpu.memory_space<vmem>>, vector<64x64xf32>
    tpu.vector_store %arg12[%c0_38, %c0_39], %60 {strides = array<i32>} : memref<64x64xf32, #tpu.memory_space<vmem>>, vector<64x64xf32>,
    return
  }
  func.func @transform_0(%arg0: i32) -> (i32, i32) {
    %c0_i32 = arith.constant 0 : i32
    %c0_i32_0 = arith.constant 0 : i32
    return %arg0, %c0_i32 : i32, i32
  }
  func.func @transform_1(%arg0: i32) -> (i32, i32) {
    %c0_i32 = arith.constant 0 : i32
    %c0_i32_0 = arith.constant 0 : i32
    %c0_i32_1 = arith.constant 0 : i32
    return %c0_i32, %c0_i32_0 : i32, i32
  }
  func.func @transform_2(%arg0: i32) -> (i32, i32) {
    %c0_i32 = arith.constant 0 : i32
    %c0_i32_0 = arith.constant 0 : i32
    %c0_i32_1 = arith.constant 0 : i32
    return %c0_i32, %c0_i32_0 : i32, i32
  }
  func.func @transform_3(%arg0: i32) -> (i32, i32) {
    %c0_i32 = arith.constant 0 : i32
    %c0_i32_0 = arith.constant 0 : i32
    %c0_i32_1 = arith.constant 0 : i32
    return %c0_i32, %c0_i32_0 : i32, i32
  }
  func.func @transform_4(%arg0: i32) -> (i32, i32) {
    %c0_i32 = arith.constant 0 : i32
    %c0_i32_0 = arith.constant 0 : i32
    %c0_i32_1 = arith.constant 0 : i32
    return %c0_i32, %c0_i32_0 : i32, i32
  }
  func.func @transform_5(%arg0: i32) -> (i32, i32) {
    %c0_i32 = arith.constant 0 : i32
    %c0_i32_0 = arith.constant 0 : i32
    %c0_i32_1 = arith.constant 0 : i32
    return %c0_i32, %c0_i32_0 : i32, i32
  }
  func.func @transform_6(%arg0: i32) -> (i32, i32) {
    %c0_i32 = arith.constant 0 : i32
    %c0_i32_0 = arith.constant 0 : i32
    %c0_i32_1 = arith.constant 0 : i32
    return %c0_i32, %c0_i32_0 : i32, i32
  }
  func.func @transform_7(%arg0: i32) -> (i32, i32) {
    %c0_i32 = arith.constant 0 : i32
    %c0_i32_0 = arith.constant 0 : i32
    %c0_i32_1 = arith.constant 0 : i32
    return %c0_i32, %c0_i32_0 : i32, i32
  }
  func.func @transform_8(%arg0: i32) -> (i32, i32) {
    %c0_i32 = arith.constant 0 : i32
    %c0_i32_0 = arith.constant 0 : i32
    %c0_i32_1 = arith.constant 0 : i32
    return %c0_i32, %c0_i32_0 : i32, i32
  }
  func.func @transform_9(%arg0: i32) -> (i32, i32, i32) {
    %c0_i32 = arith.constant 0 : i32
    %c0_i32_0 = arith.constant 0 : i32
    %c0_i32_1 = arith.constant 0 : i32
    return %c0_i32, %arg0, %c0_i32_0 : i32, i32, i32
  }
  func.func @transform_10(%arg0: i32) -> (i32, i32) {
    %c0_i32 = arith.constant 0 : i32
    %c0_i32_0 = arith.constant 0 : i32
    return %arg0, %c0_i32 : i32, i32
  }
  func.func @transform_11(%arg0: i32) -> (i32, i32) {
    %c0_i32 = arith.constant 0 : i32
    %c0_i32_0 = arith.constant 0 : i32
    return %arg0, %c0_i32 : i32, i32
  }
}

</mosaic_0001>

<llo_original>
// kernel: tpu_custom_call.1
$region0: #{tpu_custom_call.1}
  #allocation0 [shape = 'u32[]', space=smem, size = 0x4, offset = 0x4, fixed_abs, tag = 'smem constant byte address 0x4 - core index']
  #allocation1 [shape = 'u32[144,128]{1,0:T(1,128)}', space=vmem, size = 0x12000, scoped, tag = 'internal scratch']
  %s0 = inlined_call_operand.vmem [shape: f32[64,64], index: 0, kind: input, shape index: {}]
  %s1 = inlined_call_operand.vmem [shape: f32[64,128], index: 1, kind: input, shape index: {}]
  %s2 = inlined_call_operand.vmem [shape: f32[128,64], index: 2, kind: input, shape index: {}]
  %s3 = inlined_call_operand.vmem [shape: f32[1,128], index: 3, kind: input, shape index: {}]
  %s4 = inlined_call_operand.vmem [shape: f32[1,128], index: 4, kind: input, shape index: {}]
  %s5 = inlined_call_operand.vmem [shape: f32[1,128], index: 5, kind: input, shape index: {}]
  %s6 = inlined_call_operand.vmem [shape: f32[1,64], index: 6, kind: input, shape index: {}]
  %s7 = inlined_call_operand.vmem [shape: f32[64,4], index: 7, kind: input, shape index: {}]
  %s8 = inlined_call_operand.vmem [shape: f32[128,4], index: 8, kind: input, shape index: {}]
  %s9 = inlined_call_operand.vmem [shape: f32[4,64,4], index: 9, kind: output, shape index: {0}]
  %s10 = inlined_call_operand.hbm [shape: f32[64,128], index: 10, kind: output, shape index: {1}]
  %s11 = inlined_call_operand.hbm [shape: f32[64,64], index: 11, kind: output, shape index: {2}]
  %12 = xla_tuple %s9, %s10, %s11
  %s13 = sld [smem:[#allocation0]]
  $region62: #{tpu_custom_call.1} parent=0
    _
  %s15 = ssub.s32 1, %s13
  %s16 = scalar_select 0, %s15, %s13
  $region1: #{tpu_custom_call.1} parent=0
    #allocation2 [shape = 'u8[32768]{0}', space=vmem, size = 0x8000, scoped, tag = 'output window, operand 1, single buffered']
    #allocation3 [shape = 's32[1]{0}', space=sflag, size = 0x4, scoped, tag = 'scoped memory for tpu_custom_call.1']
    #allocation4 [shape = 'u8[32768]{0}', space=vmem, size = 0x8000, scoped, tag = 'output window, operand 2, single buffered']
    #allocation5 [shape = 's32[1]{0}', space=sflag, size = 0x4, scoped, tag = 'scoped memory for tpu_custom_call.1']
    %17 = vsyncpa [#allocation3], 0
    %18 = vsyncpa [#allocation5], 0
    // Predicated region
    $region2: #{tpu_custom_call.1} parent=1 // pred_check
      _
    $region3: #{tpu_custom_call.1} parent=1 // pred_check_branch
      %20 = sbr.rel (0) target = $region5
    $region4: #{tpu_custom_call.1} parent=1 // pred_region
      _
    $region5: #{tpu_custom_call.1} parent=1 // pred_fallthru
      _
    // Predicated region
    $region6: #{tpu_custom_call.1} parent=1 // pred_check
      _
    $region7: #{tpu_custom_call.1} parent=1 // pred_check_branch
      %22 = sbr.rel (0) target = $region9
    $region8: #{tpu_custom_call.1} parent=1 // pred_region
      _
    $region9: #{tpu_custom_call.1} parent=1 // pred_fallthru
      _
    // Predicated region
    $region10: #{tpu_custom_call.1} parent=1 // pred_check
      _
    $region11: #{tpu_custom_call.1} parent=1 // pred_check_branch
      %24 = sbr.rel (0) target = $region13
    $region12: #{tpu_custom_call.1} parent=1 // pred_region
      _
    $region13: #{tpu_custom_call.1} parent=1 // pred_fallthru
      _
    // Predicated region
    $region14: #{tpu_custom_call.1} parent=1 // pred_check
      _
    $region15: #{tpu_custom_call.1} parent=1 // pred_check_branch
      %26 = sbr.rel (0) target = $region17
    $region16: #{tpu_custom_call.1} parent=1 // pred_region
      _
    $region17: #{tpu_custom_call.1} parent=1 // pred_fallthru
      _
    // Predicated region
    $region18: #{tpu_custom_call.1} parent=1 // pred_check
      _
    $region19: #{tpu_custom_call.1} parent=1 // pred_check_branch
      %28 = sbr.rel (0) target = $region21
    $region20: #{tpu_custom_call.1} parent=1 // pred_region
      _
    $region21: #{tpu_custom_call.1} parent=1 // pred_fallthru
      _
    // Predicated region
    $region22: #{tpu_custom_call.1} parent=1 // pred_check
      _
    $region23: #{tpu_custom_call.1} parent=1 // pred_check_branch
      %30 = sbr.rel (0) target = $region25
    $region24: #{tpu_custom_call.1} parent=1 // pred_region
      _
    $region25: #{tpu_custom_call.1} parent=1 // pred_fallthru
      _
    // Predicated region
    $region26: #{tpu_custom_call.1} parent=1 // pred_check
      _
    $region27: #{tpu_custom_call.1} parent=1 // pred_check_branch
      %32 = sbr.rel (0) target = $region29
    $region28: #{tpu_custom_call.1} parent=1 // pred_region
      _
    $region29: #{tpu_custom_call.1} parent=1 // pred_fallthru
      _
    // Predicated region
    $region30: #{tpu_custom_call.1} parent=1 // pred_check
      _
    $region31: #{tpu_custom_call.1} parent=1 // pred_check_branch
      %34 = sbr.rel (0) target = $region33
    $region32: #{tpu_custom_call.1} parent=1 // pred_region
      _
    $region33: #{tpu_custom_call.1} parent=1 // pred_fallthru
      _
    // Predicated region
    $region34: #{tpu_custom_call.1} parent=1 // pred_check
      _
    $region35: #{tpu_custom_call.1} parent=1 // pred_check_branch
      %36 = sbr.rel (0) target = $region37
    $region36: #{tpu_custom_call.1} parent=1 // pred_region
      _
    $region37: #{tpu_custom_call.1} parent=1 // pred_fallthru
      _
    %v37 = vld [vmem:[%s0] sm:$0xff]
    %v38 = vld [vmem:[%s0 + $0x8] sm:$0xff]
    %v39 = vld [vmem:[%s0 + $0x10] sm:$0xff]
    %v40 = vld [vmem:[%s0 + $0x18] sm:$0xff]
    %v41 = vld [vmem:[%s0 + $0x20] sm:$0xff]
    %v42 = vld [vmem:[%s0 + $0x28] sm:$0xff]
    %v43 = vld [vmem:[%s0 + $0x30] sm:$0xff]
    %v44 = vld [vmem:[%s0 + $0x38] sm:$0xff]
    %v45 = vld [vmem:[%s6] sm:$0x1]
    %v46 = vld [vmem:[%s3] sm:$0x1]
    %v48 = vlaneseq
    %v49 = vshrl.u32 %v48, 7
    %v50 = vsub.s32 0, %v49
    %v51 = vrot.slane %v45, %v50
    %v53 = vsub.f32 %v37, %v51
    %v54 = vsub.f32 %v38, %v51
    %v55 = vsub.f32 %v39, %v51
    %v56 = vsub.f32 %v40, %v51
    %v57 = vsub.f32 %v41, %v51
    %v58 = vsub.f32 %v42, %v51
    %v59 = vsub.f32 %v43, %v51
    %v60 = vsub.f32 %v44, %v51
    %v61 = vld [vmem:[%s1] sm:$0xff]
    %v62 = vld [vmem:[%s1 + $0x8] sm:$0xff]
    %v63 = vld [vmem:[%s1 + $0x10] sm:$0xff]
    %v64 = vld [vmem:[%s1 + $0x18] sm:$0xff]
    %v65 = vld [vmem:[%s1 + $0x20] sm:$0xff]
    %v66 = vld [vmem:[%s1 + $0x28] sm:$0xff]
    %v67 = vld [vmem:[%s1 + $0x30] sm:$0xff]
    %v68 = vld [vmem:[%s1 + $0x38] sm:$0xff]
    %v70 = vlaneseq
    %v71 = vshrl.u32 %v70, 7
    %v72 = vsub.s32 0, %v71
    %v73 = vrot.slane %v46, %v72
    %vm75 = vcmask 523264
    %v77 = vsel %vm75, %v53, 0
    %v80 = vsel %vm75, %v54, 0
    %v83 = vsel %vm75, %v55, 0
    %v86 = vsel %vm75, %v56, 0
    %v89 = vsel %vm75, %v57, 0
    %v92 = vsel %vm75, %v58, 0
    %v95 = vsel %vm75, %v59, 0
    %v98 = vsel %vm75, %v60, 0
    %100 = vmatprep.subr.mxu0 0.0
    %101 = vmatpush1.msra.mxu0 0.0
    %102 = vmatprep.subr.mxu0 0.0
    %103 = vmatpush1.msra.mxu0 0.0
    %104 = vmatprep.subr.mxu0 0.0
    %105 = vmatpush1.msra.mxu0 0.0
    %106 = vmatprep.subr.mxu0 0.0
    %107 = vmatpush1.msra.mxu0 0.0
    %108 = vmatprep.subr.mxu0 0.0
    %109 = vmatpush1.msra.mxu0 0.0
    %110 = vmatprep.subr.mxu0 0.0
    %111 = vmatpush1.msra.mxu0 0.0
    %112 = vmatprep.subr.mxu0 0.0
    %113 = vmatpush1.msra.mxu0 0.0
    %114 = vmatprep.subr.mxu0 0.0
    %115 = vmatpush1.msra.mxu0 0.0
    %116 = vmatprep.subr.mxu0 0.0
    %117 = vmatpush1.msra.mxu0 %v68
    %118 = vmatprep.subr.mxu0 0.0
    %119 = vmatpush1.msra.mxu0 %v67
    %120 = vmatprep.subr.mxu0 0.0
    %121 = vmatpush1.msra.mxu0 %v66
    %122 = vmatprep.subr.mxu0 0.0
    %123 = vmatpush1.msra.mxu0 %v65
    %124 = vmatprep.subr.mxu0 0.0
    %125 = vmatpush1.msra.mxu0 %v64
    %126 = vmatprep.subr.mxu0 0.0
    %127 = vmatpush1.msra.mxu0 %v63
    %128 = vmatprep.subr.mxu0 0.0
    %129 = vmatpush1.msra.mxu0 %v62
    %130 = vmatprep.subr.mxu0 0.0
    %131 = vmatpush1.msra.mxu0 %v61
    %132 = vmatprep.subr.mxu0 0.0
    %133 = vmatpush2.msra.mxu0 0.0
    %134 = vmatprep.subr.mxu0 0.0
    %135 = vmatpush2.msra.mxu0 0.0
    %136 = vmatprep.subr.mxu0 0.0
    %137 = vmatpush2.msra.mxu0 0.0
    %138 = vmatprep.subr.mxu0 0.0
    %139 = vmatpush2.msra.mxu0 0.0
    %140 = vmatprep.subr.mxu0 0.0
    %141 = vmatpush2.msra.mxu0 0.0
    %142 = vmatprep.subr.mxu0 0.0
    %143 = vmatpush2.msra.mxu0 0.0
    %144 = vmatprep.subr.mxu0 0.0
    %145 = vmatpush2.msra.mxu0 0.0
    %146 = vmatprep.subr.mxu0 0.0
    %147 = vmatpush2.msra.mxu0 0.0
    %148 = vmatprep.subr.mxu0 0.0
    %149 = vmatpush2.msra.mxu0 0.0
    %150 = vmatprep.subr.mxu0 0.0
    %151 = vmatpush2.msra.mxu0 0.0
    %152 = vmatprep.subr.mxu0 0.0
    %153 = vmatpush2.msra.mxu0 0.0
    %154 = vmatprep.subr.mxu0 0.0
    %155 = vmatpush2.msra.mxu0 0.0
    %156 = vmatprep.subr.mxu0 0.0
    %157 = vmatpush2.msra.mxu0 0.0
    %158 = vmatprep.subr.mxu0 0.0
    %159 = vmatpush2.msra.mxu0 0.0
    %160 = vmatprep.subr.mxu0 0.0
    %161 = vmatpush2.msra.mxu0 0.0
    %162 = vmatprep.subr.mxu0 0.0
    %163 = vmatpush2.msra.mxu0 0.0
    %164 = vmatprep.mubr.f32.mxu0 0.0
    %165 = vmatmul.mubr.f32.gmra.mxu0 %v77
    %v166 = vpop.f32.mrf.mxu0
    %v167 = vadd.f32 %v73, %v166
    %v168 = vpop.f32.mrf.mxu0
    %169 = vmatprep.mubr.f32.mxu0 0.0
    %170 = vmatmul.mubr.f32.gmra.mxu0 %v80
    %v171 = vpop.f32.mrf.mxu0
    %v172 = vadd.f32 %v73, %v171
    %v173 = vpop.f32.mrf.mxu0
    %174 = vmatprep.mubr.f32.mxu0 0.0
    %175 = vmatmul.mubr.f32.gmra.mxu0 %v83
    %v176 = vpop.f32.mrf.mxu0
    %v177 = vadd.f32 %v73, %v176
    %v178 = vpop.f32.mrf.mxu0
    %179 = vmatprep.mubr.f32.mxu0 0.0
    %180 = vmatmul.mubr.f32.gmra.mxu0 %v86
    %v181 = vpop.f32.mrf.mxu0
    %v182 = vadd.f32 %v73, %v181
    %v183 = vpop.f32.mrf.mxu0
    %184 = vmatprep.mubr.f32.mxu0 0.0
    %185 = vmatmul.mubr.f32.gmra.mxu0 %v89
    %v186 = vpop.f32.mrf.mxu0
    %v187 = vadd.f32 %v73, %v186
    %v188 = vpop.f32.mrf.mxu0
    %189 = vmatprep.mubr.f32.mxu0 0.0
    %190 = vmatmul.mubr.f32.gmra.mxu0 %v92
    %v191 = vpop.f32.mrf.mxu0
    %v192 = vadd.f32 %v73, %v191
    %v193 = vpop.f32.mrf.mxu0
    %194 = vmatprep.mubr.f32.mxu0 0.0
    %195 = vmatmul.mubr.f32.gmra.mxu0 %v95
    %v196 = vpop.f32.mrf.mxu0
    %v197 = vadd.f32 %v73, %v196
    %v198 = vpop.f32.mrf.mxu0
    %199 = vmatprep.mubr.f32.mxu0 0.0
    %200 = vmatmul.mubr.f32.gmra.mxu0 %v98
    %v201 = vpop.f32.mrf.mxu0
    %v202 = vadd.f32 %v73, %v201
    %v203 = vpop.f32.mrf.mxu0
    %204 = vdwg.mxu0
    %v205 = vmax.f32 %v167, 0.0
    %v206 = vmax.f32 %v172, 0.0
    %v207 = vmax.f32 %v177, 0.0
    %v208 = vmax.f32 %v182, 0.0
    %v209 = vmax.f32 %v187, 0.0
    %v210 = vmax.f32 %v192, 0.0
    %v211 = vmax.f32 %v197, 0.0
    %v212 = vmax.f32 %v202, 0.0
    %v213 = vsub.f32 %v167, %v73
    %v214 = vsub.f32 %v172, %v73
    %v215 = vsub.f32 %v177, %v73
    %v216 = vsub.f32 %v182, %v73
    %v217 = vsub.f32 %v187, %v73
    %v218 = vsub.f32 %v192, %v73
    %v219 = vsub.f32 %v197, %v73
    %v220 = vsub.f32 %v202, %v73
    %v221 = vld [vmem:[%s5] sm:$0x1]
    %v222 = vmul.f32 %v221, 1.442695
    %v223 = vpow.pop %v222
    %v225 = vlaneseq
    %v226 = vshrl.u32 %v225, 7
    %v227 = vsub.s32 0, %v226
    %v228 = vrot.slane %v223, %v227
    %v230 = vmul.f32 %v213, %v228
    %v231 = vmul.f32 %v214, %v228
    %v232 = vmul.f32 %v215, %v228
    %v233 = vmul.f32 %v216, %v228
    %v234 = vmul.f32 %v217, %v228
    %v235 = vmul.f32 %v218, %v228
    %v236 = vmul.f32 %v219, %v228
    %v237 = vmul.f32 %v220, %v228
    %v238 = vld [vmem:[%s4] sm:$0x1]
    %v240 = vlaneseq
    %v241 = vshrl.u32 %v240, 7
    %v242 = vsub.s32 0, %v241
    %v243 = vrot.slane %v238, %v242
    %v245 = vadd.f32 %v230, %v243
    %v246 = vadd.f32 %v231, %v243
    %v247 = vadd.f32 %v232, %v243
    %v248 = vadd.f32 %v233, %v243
    %v249 = vadd.f32 %v234, %v243
    %v250 = vadd.f32 %v235, %v243
    %v251 = vadd.f32 %v236, %v243
    %v252 = vadd.f32 %v237, %v243
    %vm253 = vcmp.gt.f32.partialorder %v167, 0.0
    %vm254 = vcmp.gt.f32.partialorder %v172, 0.0
    %vm255 = vcmp.gt.f32.partialorder %v177, 0.0
    %vm256 = vcmp.gt.f32.partialorder %v182, 0.0
    %vm257 = vcmp.gt.f32.partialorder %v187, 0.0
    %vm258 = vcmp.gt.f32.partialorder %v192, 0.0
    %vm259 = vcmp.gt.f32.partialorder %v197, 0.0
    %vm260 = vcmp.gt.f32.partialorder %v202, 0.0
    %v261 = vmax.f32 %v245, 0.0
    %v262 = vmax.f32 %v246, 0.0
    %v263 = vmax.f32 %v247, 0.0
    %v264 = vmax.f32 %v248, 0.0
    %v265 = vmax.f32 %v249, 0.0
    %v266 = vmax.f32 %v250, 0.0
    %v267 = vmax.f32 %v251, 0.0
    %v268 = vmax.f32 %v252, 0.0
    %v269 = vsel %vm253, %v261, 0.0
    %v270 = vsel %vm254, %v262, 0.0
    %v271 = vsel %vm255, %v263, 0.0
    %v272 = vsel %vm256, %v264, 0.0
    %v273 = vsel %vm257, %v265, 0.0
    %v274 = vsel %vm258, %v266, 0.0
    %v275 = vsel %vm259, %v267, 0.0
    %v276 = vsel %vm260, %v268, 0.0
    %v277 = vld [vmem:[%s2] sm:$0xff]
    %v278 = vld [vmem:[%s2 + $0x8] sm:$0xff]
    %v279 = vld [vmem:[%s2 + $0x10] sm:$0xff]
    %v280 = vld [vmem:[%s2 + $0x18] sm:$0xff]
    %v281 = vld [vmem:[%s2 + $0x20] sm:$0xff]
    %v282 = vld [vmem:[%s2 + $0x28] sm:$0xff]
    %v283 = vld [vmem:[%s2 + $0x30] sm:$0xff]
    %v284 = vld [vmem:[%s2 + $0x38] sm:$0xff]
    %v285 = vld [vmem:[%s2 + $0x40] sm:$0xff]
    %v286 = vld [vmem:[%s2 + $0x48] sm:$0xff]
    %v287 = vld [vmem:[%s2 + $0x50] sm:$0xff]
    %v288 = vld [vmem:[%s2 + $0x58] sm:$0xff]
    %v289 = vld [vmem:[%s2 + $0x60] sm:$0xff]
    %v290 = vld [vmem:[%s2 + $0x68] sm:$0xff]
    %v291 = vld [vmem:[%s2 + $0x70] sm:$0xff]
    %v292 = vld [vmem:[%s2 + $0x78] sm:$0xff]
    %293 = vmatprep.subr.mxu0 0.0
    %294 = vmatpush1.msra.mxu0 %v292
    %295 = vmatprep.subr.mxu0 0.0
    %296 = vmatpush1.msra.mxu0 %v291
    %297 = vmatprep.subr.mxu0 0.0
    %298 = vmatpush1.msra.mxu0 %v290
    %299 = vmatprep.subr.mxu0 0.0
    %300 = vmatpush1.msra.mxu0 %v289
    %301 = vmatprep.subr.mxu0 0.0
    %302 = vmatpush1.msra.mxu0 %v288
    %303 = vmatprep.subr.mxu0 0.0
    %304 = vmatpush1.msra.mxu0 %v287
    %305 = vmatprep.subr.mxu0 0.0
    %306 = vmatpush1.msra.mxu0 %v286
    %307 = vmatprep.subr.mxu0 0.0
    %308 = vmatpush1.msra.mxu0 %v285
    %309 = vmatprep.subr.mxu0 0.0
    %310 = vmatpush1.msra.mxu0 %v284
    %311 = vmatprep.subr.mxu0 0.0
    %312 = vmatpush1.msra.mxu0 %v283
    %313 = vmatprep.subr.mxu0 0.0
    %314 = vmatpush1.msra.mxu0 %v282
    %315 = vmatprep.subr.mxu0 0.0
    %316 = vmatpush1.msra.mxu0 %v281
    %317 = vmatprep.subr.mxu0 0.0
    %318 = vmatpush1.msra.mxu0 %v280
    %319 = vmatprep.subr.mxu0 0.0
    %320 = vmatpush1.msra.mxu0 %v279
    %321 = vmatprep.subr.mxu0 0.0
    %322 = vmatpush1.msra.mxu0 %v278
    %323 = vmatprep.subr.mxu0 0.0
    %324 = vmatpush1.msra.mxu0 %v277
    %325 = vmatprep.subr.mxu0 0.0
    %326 = vmatpush2.msra.mxu0 0.0
    %327 = vmatprep.subr.mxu0 0.0
    %328 = vmatpush2.msra.mxu0 0.0
    %329 = vmatprep.subr.mxu0 0.0
    %330 = vmatpush2.msra.mxu0 0.0
    %331 = vmatprep.subr.mxu0 0.0
    %332 = vmatpush2.msra.mxu0 0.0
    %333 = vmatprep.subr.mxu0 0.0
    %334 = vmatpush2.msra.mxu0 0.0
    %335 = vmatprep.subr.mxu0 0.0
    %336 = vmatpush2.msra.mxu0 0.0
    %337 = vmatprep.subr.mxu0 0.0
    %338 = vmatpush2.msra.mxu0 0.0
    %339 = vmatprep.subr.mxu0 0.0
    %340 = vmatpush2.msra.mxu0 0.0
    %341 = vmatprep.subr.mxu0 0.0
    %342 = vmatpush2.msra.mxu0 0.0
    %343 = vmatprep.subr.mxu0 0.0
    %344 = vmatpush2.msra.mxu0 0.0
    %345 = vmatprep.subr.mxu0 0.0
    %346 = vmatpush2.msra.mxu0 0.0
    %347 = vmatprep.subr.mxu0 0.0
    %348 = vmatpush2.msra.mxu0 0.0
    %349 = vmatprep.subr.mxu0 0.0
    %350 = vmatpush2.msra.mxu0 0.0
    %351 = vmatprep.subr.mxu0 0.0
    %352 = vmatpush2.msra.mxu0 0.0
    %353 = vmatprep.subr.mxu0 0.0
    %354 = vmatpush2.msra.mxu0 0.0
    %355 = vmatprep.subr.mxu0 0.0
    %356 = vmatpush2.msra.mxu0 0.0
    %357 = vmatprep.mubr.f32.mxu0 0.0
    %358 = vmatmul.mubr.f32.gmra.mxu0 %v269
    %v359 = vpop.f32.mrf.mxu0
    %v360 = vadd.f32 0.0, %v359
    %v361 = vpop.f32.mrf.mxu0
    %362 = vmatprep.mubr.f32.mxu0 0.0
    %363 = vmatmul.mubr.f32.gmra.mxu0 %v270
    %v364 = vpop.f32.mrf.mxu0
    %v365 = vadd.f32 0.0, %v364
    %v366 = vpop.f32.mrf.mxu0
    %367 = vmatprep.mubr.f32.mxu0 0.0
    %368 = vmatmul.mubr.f32.gmra.mxu0 %v271
    %v369 = vpop.f32.mrf.mxu0
    %v370 = vadd.f32 0.0, %v369
    %v371 = vpop.f32.mrf.mxu0
    %372 = vmatprep.mubr.f32.mxu0 0.0
    %373 = vmatmul.mubr.f32.gmra.mxu0 %v272
    %v374 = vpop.f32.mrf.mxu0
    %v375 = vadd.f32 0.0, %v374
    %v376 = vpop.f32.mrf.mxu0
    %377 = vmatprep.mubr.f32.mxu0 0.0
    %378 = vmatmul.mubr.f32.gmra.mxu0 %v273
    %v379 = vpop.f32.mrf.mxu0
    %v380 = vadd.f32 0.0, %v379
    %v381 = vpop.f32.mrf.mxu0
    %382 = vmatprep.mubr.f32.mxu0 0.0
    %383 = vmatmul.mubr.f32.gmra.mxu0 %v274
    %v384 = vpop.f32.mrf.mxu0
    %v385 = vadd.f32 0.0, %v384
    %v386 = vpop.f32.mrf.mxu0
    %387 = vmatprep.mubr.f32.mxu0 0.0
    %388 = vmatmul.mubr.f32.gmra.mxu0 %v275
    %v389 = vpop.f32.mrf.mxu0
    %v390 = vadd.f32 0.0, %v389
    %v391 = vpop.f32.mrf.mxu0
    %392 = vmatprep.mubr.f32.mxu0 0.0
    %393 = vmatmul.mubr.f32.gmra.mxu0 %v276
    %v394 = vpop.f32.mrf.mxu0
    %v395 = vadd.f32 0.0, %v394
    %v396 = vpop.f32.mrf.mxu0
    %397 = vmatprep.mubr.f32.mxu0 0.0
    %398 = vmatmul.mubr.f32.gmra.mxu0 %v205
    %v399 = vpop.f32.mrf.mxu0
    %v400 = vadd.f32 0.0, %v399
    %v401 = vpop.f32.mrf.mxu0
    %402 = vmatprep.mubr.f32.mxu0 0.0
    %403 = vmatmul.mubr.f32.gmra.mxu0 %v206
    %v404 = vpop.f32.mrf.mxu0
    %v405 = vadd.f32 0.0, %v404
    %v406 = vpop.f32.mrf.mxu0
    %407 = vmatprep.mubr.f32.mxu0 0.0
    %408 = vmatmul.mubr.f32.gmra.mxu0 %v207
    %v409 = vpop.f32.mrf.mxu0
    %v410 = vadd.f32 0.0, %v409
    %v411 = vpop.f32.mrf.mxu0
    %412 = vmatprep.mubr.f32.mxu0 0.0
    %413 = vmatmul.mubr.f32.gmra.mxu0 %v208
    %v414 = vpop.f32.mrf.mxu0
    %v415 = vadd.f32 0.0, %v414
    %v416 = vpop.f32.mrf.mxu0
    %417 = vmatprep.mubr.f32.mxu0 0.0
    %418 = vmatmul.mubr.f32.gmra.mxu0 %v209
    %v419 = vpop.f32.mrf.mxu0
    %v420 = vadd.f32 0.0, %v419
    %v421 = vpop.f32.mrf.mxu0
    %422 = vmatprep.mubr.f32.mxu0 0.0
    %423 = vmatmul.mubr.f32.gmra.mxu0 %v210
    %v424 = vpop.f32.mrf.mxu0
    %v425 = vadd.f32 0.0, %v424
    %v426 = vpop.f32.mrf.mxu0
    %427 = vmatprep.mubr.f32.mxu0 0.0
    %428 = vmatmul.mubr.f32.gmra.mxu0 %v211
    %v429 = vpop.f32.mrf.mxu0
    %v430 = vadd.f32 0.0, %v429
    %v431 = vpop.f32.mrf.mxu0
    %432 = vmatprep.mubr.f32.mxu0 0.0
    %433 = vmatmul.mubr.f32.gmra.mxu0 %v212
    %v434 = vpop.f32.mrf.mxu0
    %v435 = vadd.f32 0.0, %v434
    %v436 = vpop.f32.mrf.mxu0
    %437 = vdwg.mxu0
    %v438 = vsub.f32 %v360, %v53
    %v439 = vsub.f32 %v365, %v54
    %v440 = vsub.f32 %v370, %v55
    %v441 = vsub.f32 %v375, %v56
    %v442 = vsub.f32 %v380, %v57
    %v443 = vsub.f32 %v385, %v58
    %v444 = vsub.f32 %v390, %v59
    %v445 = vsub.f32 %v395, %v60
    %v446 = vsub.f32 %v400, %v53
    %v447 = vsub.f32 %v405, %v54
    %v448 = vsub.f32 %v410, %v55
    %v449 = vsub.f32 %v415, %v56
    %v450 = vsub.f32 %v420, %v57
    %v451 = vsub.f32 %v425, %v58
    %v452 = vsub.f32 %v430, %v59
    %v453 = vsub.f32 %v435, %v60
    %v454 = vld [vmem:[%s7] sm:$0xff]
    %v455 = vld [vmem:[%s7 + $0x8] sm:$0xff]
    %v456 = vld [vmem:[%s7 + $0x10] sm:$0xff]
    %v457 = vld [vmem:[%s7 + $0x18] sm:$0xff]
    %v458 = vld [vmem:[%s7 + $0x20] sm:$0xff]
    %v459 = vld [vmem:[%s7 + $0x28] sm:$0xff]
    %v460 = vld [vmem:[%s7 + $0x30] sm:$0xff]
    %v461 = vld [vmem:[%s7 + $0x38] sm:$0xff]
    %v462 = vld [vmem:[%s8] sm:$0xff]
    %v463 = vld [vmem:[%s8 + $0x8] sm:$0xff]
    %v464 = vld [vmem:[%s8 + $0x10] sm:$0xff]
    %v465 = vld [vmem:[%s8 + $0x18] sm:$0xff]
    %v466 = vld [vmem:[%s8 + $0x20] sm:$0xff]
    %v467 = vld [vmem:[%s8 + $0x28] sm:$0xff]
    %v468 = vld [vmem:[%s8 + $0x30] sm:$0xff]
    %v469 = vld [vmem:[%s8 + $0x38] sm:$0xff]
    %v470 = vld [vmem:[%s8 + $0x40] sm:$0xff]
    %v471 = vld [vmem:[%s8 + $0x48] sm:$0xff]
    %v472 = vld [vmem:[%s8 + $0x50] sm:$0xff]
    %v473 = vld [vmem:[%s8 + $0x58] sm:$0xff]
    %v474 = vld [vmem:[%s8 + $0x60] sm:$0xff]
    %v475 = vld [vmem:[%s8 + $0x68] sm:$0xff]
    %v476 = vld [vmem:[%s8 + $0x70] sm:$0xff]
    %v477 = vld [vmem:[%s8 + $0x78] sm:$0xff]
    %v478 = vmul.f32 %v438, %v438
    %v479 = vmul.f32 %v439, %v439
    %v480 = vmul.f32 %v440, %v440
    %v481 = vmul.f32 %v441, %v441
    %v482 = vmul.f32 %v442, %v442
    %v483 = vmul.f32 %v443, %v443
    %v484 = vmul.f32 %v444, %v444
    %v485 = vmul.f32 %v445, %v445
    %v487 = vsel %vm75, %v478, 0
    %v490 = vsel %vm75, %v479, 0
    %v493 = vsel %vm75, %v480, 0
    %v496 = vsel %vm75, %v481, 0
    %v499 = vsel %vm75, %v482, 0
    %v502 = vsel %vm75, %v483, 0
    %v505 = vsel %vm75, %v484, 0
    %v508 = vsel %vm75, %v485, 0
    %510 = vmatprep.subr.mxu0 0.0
    %511 = vmatpush1.msra.mxu0 0.0
    %512 = vmatprep.subr.mxu0 0.0
    %513 = vmatpush1.msra.mxu0 0.0
    %514 = vmatprep.subr.mxu0 0.0
    %515 = vmatpush1.msra.mxu0 0.0
    %516 = vmatprep.subr.mxu0 0.0
    %517 = vmatpush1.msra.mxu0 0.0
    %518 = vmatprep.subr.mxu0 0.0
    %519 = vmatpush1.msra.mxu0 0.0
    %520 = vmatprep.subr.mxu0 0.0
    %521 = vmatpush1.msra.mxu0 0.0
    %522 = vmatprep.subr.mxu0 0.0
    %523 = vmatpush1.msra.mxu0 0.0
    %524 = vmatprep.subr.mxu0 0.0
    %525 = vmatpush1.msra.mxu0 0.0
    %526 = vmatprep.subr.mxu0 0.0
    %527 = vmatpush1.msra.mxu0 %v461
    %528 = vmatprep.subr.mxu0 0.0
    %529 = vmatpush1.msra.mxu0 %v460
    %530 = vmatprep.subr.mxu0 0.0
    %531 = vmatpush1.msra.mxu0 %v459
    %532 = vmatprep.subr.mxu0 0.0
    %533 = vmatpush1.msra.mxu0 %v458
    %534 = vmatprep.subr.mxu0 0.0
    %535 = vmatpush1.msra.mxu0 %v457
    %536 = vmatprep.subr.mxu0 0.0
    %537 = vmatpush1.msra.mxu0 %v456
    %538 = vmatprep.subr.mxu0 0.0
    %539 = vmatpush1.msra.mxu0 %v455
    %540 = vmatprep.subr.mxu0 0.0
    %541 = vmatpush1.msra.mxu0 %v454
    %542 = vmatprep.subr.mxu0 0.0
    %543 = vmatpush2.msra.mxu0 0.0
    %544 = vmatprep.subr.mxu0 0.0
    %545 = vmatpush2.msra.mxu0 0.0
    %546 = vmatprep.subr.mxu0 0.0
    %547 = vmatpush2.msra.mxu0 0.0
    %548 = vmatprep.subr.mxu0 0.0
    %549 = vmatpush2.msra.mxu0 0.0
    %550 = vmatprep.subr.mxu0 0.0
    %551 = vmatpush2.msra.mxu0 0.0
    %552 = vmatprep.subr.mxu0 0.0
    %553 = vmatpush2.msra.mxu0 0.0
    %554 = vmatprep.subr.mxu0 0.0
    %555 = vmatpush2.msra.mxu0 0.0
    %556 = vmatprep.subr.mxu0 0.0
    %557 = vmatpush2.msra.mxu0 0.0
    %558 = vmatprep.subr.mxu0 0.0
    %559 = vmatpush2.msra.mxu0 0.0
    %560 = vmatprep.subr.mxu0 0.0
    %561 = vmatpush2.msra.mxu0 0.0
    %562 = vmatprep.subr.mxu0 0.0
    %563 = vmatpush2.msra.mxu0 0.0
    %564 = vmatprep.subr.mxu0 0.0
    %565 = vmatpush2.msra.mxu0 0.0
    %566 = vmatprep.subr.mxu0 0.0
    %567 = vmatpush2.msra.mxu0 0.0
    %568 = vmatprep.subr.mxu0 0.0
    %569 = vmatpush2.msra.mxu0 0.0
    %570 = vmatprep.subr.mxu0 0.0
    %571 = vmatpush2.msra.mxu0 0.0
    %572 = vmatprep.subr.mxu0 0.0
    %573 = vmatpush2.msra.mxu0 0.0
    %574 = vmatprep.mubr.f32.mxu0 0.0
    %575 = vmatmul.mubr.f32.gmra.mxu0 %v487
    %v576 = vpop.f32.mrf.mxu0
    %v577 = vadd.f32 0.0, %v576
    %v578 = vpop.f32.mrf.mxu0
    %579 = vmatprep.mubr.f32.mxu0 0.0
    %580 = vmatmul.mubr.f32.gmra.mxu0 %v490
    %v581 = vpop.f32.mrf.mxu0
    %v582 = vadd.f32 0.0, %v581
    %v583 = vpop.f32.mrf.mxu0
    %584 = vmatprep.mubr.f32.mxu0 0.0
    %585 = vmatmul.mubr.f32.gmra.mxu0 %v493
    %v586 = vpop.f32.mrf.mxu0
    %v587 = vadd.f32 0.0, %v586
    %v588 = vpop.f32.mrf.mxu0
    %589 = vmatprep.mubr.f32.mxu0 0.0
    %590 = vmatmul.mubr.f32.gmra.mxu0 %v496
    %v591 = vpop.f32.mrf.mxu0
    %v592 = vadd.f32 0.0, %v591
    %v593 = vpop.f32.mrf.mxu0
    %594 = vmatprep.mubr.f32.mxu0 0.0
    %595 = vmatmul.mubr.f32.gmra.mxu0 %v499
    %v596 = vpop.f32.mrf.mxu0
    %v597 = vadd.f32 0.0, %v596
    %v598 = vpop.f32.mrf.mxu0
    %599 = vmatprep.mubr.f32.mxu0 0.0
    %600 = vmatmul.mubr.f32.gmra.mxu0 %v502
    %v601 = vpop.f32.mrf.mxu0
    %v602 = vadd.f32 0.0, %v601
    %v603 = vpop.f32.mrf.mxu0
    %604 = vmatprep.mubr.f32.mxu0 0.0
    %605 = vmatmul.mubr.f32.gmra.mxu0 %v505
    %v606 = vpop.f32.mrf.mxu0
    %v607 = vadd.f32 0.0, %v606
    %v608 = vpop.f32.mrf.mxu0
    %609 = vmatprep.mubr.f32.mxu0 0.0
    %610 = vmatmul.mubr.f32.gmra.mxu0 %v508
    %v611 = vpop.f32.mrf.mxu0
    %v612 = vadd.f32 0.0, %v611
    %v613 = vpop.f32.mrf.mxu0
    %614 = vdwg.mxu0
    %v615 = vmul.f32 %v577, 0.0625
    %v616 = vmul.f32 %v582, 0.0625
    %v617 = vmul.f32 %v587, 0.0625
    %v618 = vmul.f32 %v592, 0.0625
    %v619 = vmul.f32 %v597, 0.0625
    %v620 = vmul.f32 %v602, 0.0625
    %v621 = vmul.f32 %v607, 0.0625
    %v622 = vmul.f32 %v612, 0.0625
    %v623 = vmul.f32 %v446, %v446
    %v624 = vmul.f32 %v447, %v447
    %v625 = vmul.f32 %v448, %v448
    %v626 = vmul.f32 %v449, %v449
    %v627 = vmul.f32 %v450, %v450
    %v628 = vmul.f32 %v451, %v451
    %v629 = vmul.f32 %v452, %v452
    %v630 = vmul.f32 %v453, %v453
    %v632 = vsel %vm75, %v623, 0
    %v635 = vsel %vm75, %v624, 0
    %v638 = vsel %vm75, %v625, 0
    %v641 = vsel %vm75, %v626, 0
    %v644 = vsel %vm75, %v627, 0
    %v647 = vsel %vm75, %v628, 0
    %v650 = vsel %vm75, %v629, 0
    %v653 = vsel %vm75, %v630, 0
    %655 = vmatprep.subr.mxu0 0.0
    %656 = vmatpush1.msra.mxu0 0.0
    %657 = vmatprep.subr.mxu0 0.0
    %658 = vmatpush1.msra.mxu0 0.0
    %659 = vmatprep.subr.mxu0 0.0
    %660 = vmatpush1.msra.mxu0 0.0
    %661 = vmatprep.subr.mxu0 0.0
    %662 = vmatpush1.msra.mxu0 0.0
    %663 = vmatprep.subr.mxu0 0.0
    %664 = vmatpush1.msra.mxu0 0.0
    %665 = vmatprep.subr.mxu0 0.0
    %666 = vmatpush1.msra.mxu0 0.0
    %667 = vmatprep.subr.mxu0 0.0
    %668 = vmatpush1.msra.mxu0 0.0
    %669 = vmatprep.subr.mxu0 0.0
    %670 = vmatpush1.msra.mxu0 0.0
    %671 = vmatprep.subr.mxu0 0.0
    %672 = vmatpush1.msra.mxu0 %v461
    %673 = vmatprep.subr.mxu0 0.0
    %674 = vmatpush1.msra.mxu0 %v460
    %675 = vmatprep.subr.mxu0 0.0
    %676 = vmatpush1.msra.mxu0 %v459
    %677 = vmatprep.subr.mxu0 0.0
    %678 = vmatpush1.msra.mxu0 %v458
    %679 = vmatprep.subr.mxu0 0.0
    %680 = vmatpush1.msra.mxu0 %v457
    %681 = vmatprep.subr.mxu0 0.0
    %682 = vmatpush1.msra.mxu0 %v456
    %683 = vmatprep.subr.mxu0 0.0
    %684 = vmatpush1.msra.mxu0 %v455
    %685 = vmatprep.subr.mxu0 0.0
    %686 = vmatpush1.msra.mxu0 %v454
    %687 = vmatprep.subr.mxu0 0.0
    %688 = vmatpush2.msra.mxu0 0.0
    %689 = vmatprep.subr.mxu0 0.0
    %690 = vmatpush2.msra.mxu0 0.0
    %691 = vmatprep.subr.mxu0 0.0
    %692 = vmatpush2.msra.mxu0 0.0
    %693 = vmatprep.subr.mxu0 0.0
    %694 = vmatpush2.msra.mxu0 0.0
    %695 = vmatprep.subr.mxu0 0.0
    %696 = vmatpush2.msra.mxu0 0.0
    %697 = vmatprep.subr.mxu0 0.0
    %698 = vmatpush2.msra.mxu0 0.0
    %699 = vmatprep.subr.mxu0 0.0
    %700 = vmatpush2.msra.mxu0 0.0
    %701 = vmatprep.subr.mxu0 0.0
    %702 = vmatpush2.msra.mxu0 0.0
    %703 = vmatprep.subr.mxu0 0.0
    %704 = vmatpush2.msra.mxu0 0.0
    %705 = vmatprep.subr.mxu0 0.0
    %706 = vmatpush2.msra.mxu0 0.0
    %707 = vmatprep.subr.mxu0 0.0
    %708 = vmatpush2.msra.mxu0 0.0
    %709 = vmatprep.subr.mxu0 0.0
    %710 = vmatpush2.msra.mxu0 0.0
    %711 = vmatprep.subr.mxu0 0.0
    %712 = vmatpush2.msra.mxu0 0.0
    %713 = vmatprep.subr.mxu0 0.0
    %714 = vmatpush2.msra.mxu0 0.0
    %715 = vmatprep.subr.mxu0 0.0
    %716 = vmatpush2.msra.mxu0 0.0
    %717 = vmatprep.subr.mxu0 0.0
    %718 = vmatpush2.msra.mxu0 0.0
    %719 = vmatprep.mubr.f32.mxu0 0.0
    %720 = vmatmul.mubr.f32.gmra.mxu0 %v632
    %v721 = vpop.f32.mrf.mxu0
    %v722 = vadd.f32 0.0, %v721
    %v723 = vpop.f32.mrf.mxu0
    %724 = vmatprep.mubr.f32.mxu0 0.0
    %725 = vmatmul.mubr.f32.gmra.mxu0 %v635
    %v726 = vpop.f32.mrf.mxu0
    %v727 = vadd.f32 0.0, %v726
    %v728 = vpop.f32.mrf.mxu0
    %729 = vmatprep.mubr.f32.mxu0 0.0
    %730 = vmatmul.mubr.f32.gmra.mxu0 %v638
    %v731 = vpop.f32.mrf.mxu0
    %v732 = vadd.f32 0.0, %v731
    %v733 = vpop.f32.mrf.mxu0
    %734 = vmatprep.mubr.f32.mxu0 0.0
    %735 = vmatmul.mubr.f32.gmra.mxu0 %v641
    %v736 = vpop.f32.mrf.mxu0
    %v737 = vadd.f32 0.0, %v736
    %v738 = vpop.f32.mrf.mxu0
    %739 = vmatprep.mubr.f32.mxu0 0.0
    %740 = vmatmul.mubr.f32.gmra.mxu0 %v644
    %v741 = vpop.f32.mrf.mxu0
    %v742 = vadd.f32 0.0, %v741
    %v743 = vpop.f32.mrf.mxu0
    %744 = vmatprep.mubr.f32.mxu0 0.0
    %745 = vmatmul.mubr.f32.gmra.mxu0 %v647
    %v746 = vpop.f32.mrf.mxu0
    %v747 = vadd.f32 0.0, %v746
    %v748 = vpop.f32.mrf.mxu0
    %749 = vmatprep.mubr.f32.mxu0 0.0
    %750 = vmatmul.mubr.f32.gmra.mxu0 %v650
    %v751 = vpop.f32.mrf.mxu0
    %v752 = vadd.f32 0.0, %v751
    %v753 = vpop.f32.mrf.mxu0
    %754 = vmatprep.mubr.f32.mxu0 0.0
    %755 = vmatmul.mubr.f32.gmra.mxu0 %v653
    %v756 = vpop.f32.mrf.mxu0
    %v757 = vadd.f32 0.0, %v756
    %v758 = vpop.f32.mrf.mxu0
    %759 = vdwg.mxu0
    %760 = vmatprep.subr.mxu0 0.0
    %761 = vmatpush1.msra.mxu0 %v477
    %762 = vmatprep.subr.mxu0 0.0
    %763 = vmatpush1.msra.mxu0 %v476
    %764 = vmatprep.subr.mxu0 0.0
    %765 = vmatpush1.msra.mxu0 %v475
    %766 = vmatprep.subr.mxu0 0.0
    %767 = vmatpush1.msra.mxu0 %v474
    %768 = vmatprep.subr.mxu0 0.0
    %769 = vmatpush1.msra.mxu0 %v473
    %770 = vmatprep.subr.mxu0 0.0
    %771 = vmatpush1.msra.mxu0 %v472
    %772 = vmatprep.subr.mxu0 0.0
    %773 = vmatpush1.msra.mxu0 %v471
    %774 = vmatprep.subr.mxu0 0.0
    %775 = vmatpush1.msra.mxu0 %v470
    %776 = vmatprep.subr.mxu0 0.0
    %777 = vmatpush1.msra.mxu0 %v469
    %778 = vmatprep.subr.mxu0 0.0
    %779 = vmatpush1.msra.mxu0 %v468
    %780 = vmatprep.subr.mxu0 0.0
    %781 = vmatpush1.msra.mxu0 %v467
    %782 = vmatprep.subr.mxu0 0.0
    %783 = vmatpush1.msra.mxu0 %v466
    %784 = vmatprep.subr.mxu0 0.0
    %785 = vmatpush1.msra.mxu0 %v465
    %786 = vmatprep.subr.mxu0 0.0
    %787 = vmatpush1.msra.mxu0 %v464
    %788 = vmatprep.subr.mxu0 0.0
    %789 = vmatpush1.msra.mxu0 %v463
    %790 = vmatprep.subr.mxu0 0.0
    %791 = vmatpush1.msra.mxu0 %v462
    %792 = vmatprep.subr.mxu0 0.0
    %793 = vmatpush2.msra.mxu0 0.0
    %794 = vmatprep.subr.mxu0 0.0
    %795 = vmatpush2.msra.mxu0 0.0
    %796 = vmatprep.subr.mxu0 0.0
    %797 = vmatpush2.msra.mxu0 0.0
    %798 = vmatprep.subr.mxu0 0.0
    %799 = vmatpush2.msra.mxu0 0.0
    %800 = vmatprep.subr.mxu0 0.0
    %801 = vmatpush2.msra.mxu0 0.0
    %802 = vmatprep.subr.mxu0 0.0
    %803 = vmatpush2.msra.mxu0 0.0
    %804 = vmatprep.subr.mxu0 0.0
    %805 = vmatpush2.msra.mxu0 0.0
    %806 = vmatprep.subr.mxu0 0.0
    %807 = vmatpush2.msra.mxu0 0.0
    %808 = vmatprep.subr.mxu0 0.0
    %809 = vmatpush2.msra.mxu0 0.0
    %810 = vmatprep.subr.mxu0 0.0
    %811 = vmatpush2.msra.mxu0 0.0
    %812 = vmatprep.subr.mxu0 0.0
    %813 = vmatpush2.msra.mxu0 0.0
    %814 = vmatprep.subr.mxu0 0.0
    %815 = vmatpush2.msra.mxu0 0.0
    %816 = vmatprep.subr.mxu0 0.0
    %817 = vmatpush2.msra.mxu0 0.0
    %818 = vmatprep.subr.mxu0 0.0
    %819 = vmatpush2.msra.mxu0 0.0
    %820 = vmatprep.subr.mxu0 0.0
    %821 = vmatpush2.msra.mxu0 0.0
    %822 = vmatprep.subr.mxu0 0.0
    %823 = vmatpush2.msra.mxu0 0.0
    %824 = vmatprep.mubr.f32.mxu0 0.0
    %825 = vmatmul.mubr.f32.gmra.mxu0 %v205
    %v826 = vpop.f32.mrf.mxu0
    %v827 = vadd.f32 0.0, %v826
    %v828 = vpop.f32.mrf.mxu0
    %829 = vmatprep.mubr.f32.mxu0 0.0
    %830 = vmatmul.mubr.f32.gmra.mxu0 %v206
    %v831 = vpop.f32.mrf.mxu0
    %v832 = vadd.f32 0.0, %v831
    %v833 = vpop.f32.mrf.mxu0
    %834 = vmatprep.mubr.f32.mxu0 0.0
    %835 = vmatmul.mubr.f32.gmra.mxu0 %v207
    %v836 = vpop.f32.mrf.mxu0
    %v837 = vadd.f32 0.0, %v836
    %v838 = vpop.f32.mrf.mxu0
    %839 = vmatprep.mubr.f32.mxu0 0.0
    %840 = vmatmul.mubr.f32.gmra.mxu0 %v208
    %v841 = vpop.f32.mrf.mxu0
    %v842 = vadd.f32 0.0, %v841
    %v843 = vpop.f32.mrf.mxu0
    %844 = vmatprep.mubr.f32.mxu0 0.0
    %845 = vmatmul.mubr.f32.gmra.mxu0 %v209
    %v846 = vpop.f32.mrf.mxu0
    %v847 = vadd.f32 0.0, %v846
    %v848 = vpop.f32.mrf.mxu0
    %849 = vmatprep.mubr.f32.mxu0 0.0
    %850 = vmatmul.mubr.f32.gmra.mxu0 %v210
    %v851 = vpop.f32.mrf.mxu0
    %v852 = vadd.f32 0.0, %v851
    %v853 = vpop.f32.mrf.mxu0
    %854 = vmatprep.mubr.f32.mxu0 0.0
    %855 = vmatmul.mubr.f32.gmra.mxu0 %v211
    %v856 = vpop.f32.mrf.mxu0
    %v857 = vadd.f32 0.0, %v856
    %v858 = vpop.f32.mrf.mxu0
    %859 = vmatprep.mubr.f32.mxu0 0.0
    %860 = vmatmul.mubr.f32.gmra.mxu0 %v212
    %v861 = vpop.f32.mrf.mxu0
    %v862 = vadd.f32 0.0, %v861
    %v863 = vpop.f32.mrf.mxu0
    %864 = vdwg.mxu0
    %v865 = vmul.f32 %v827, 0.2
    %v866 = vmul.f32 %v832, 0.2
    %v867 = vmul.f32 %v837, 0.2
    %v868 = vmul.f32 %v842, 0.2
    %v869 = vmul.f32 %v847, 0.2
    %v870 = vmul.f32 %v852, 0.2
    %v871 = vmul.f32 %v857, 0.2
    %v872 = vmul.f32 %v862, 0.2
    %v873 = vadd.f32 %v615, %v865
    %v874 = vadd.f32 %v616, %v866
    %v875 = vadd.f32 %v617, %v867
    %v876 = vadd.f32 %v618, %v868
    %v877 = vadd.f32 %v619, %v869
    %v878 = vadd.f32 %v620, %v870
    %v879 = vadd.f32 %v621, %v871
    %v880 = vadd.f32 %v622, %v872
    %v881 = vadd.f32 %v873, %v722
    %v882 = vadd.f32 %v874, %v727
    %v883 = vadd.f32 %v875, %v732
    %v884 = vadd.f32 %v876, %v737
    %v885 = vadd.f32 %v877, %v742
    %v886 = vadd.f32 %v878, %v747
    %v887 = vadd.f32 %v879, %v752
    %v888 = vadd.f32 %v880, %v757
    %vm889 = vcmask 31744
    %890 = vst.msk [vmem:[%s9] sm:$0xff] %vm889, %v615
    %891 = vst.msk [vmem:[%s9 + $0x8] sm:$0xff] %vm889, %v616
    %892 = vst.msk [vmem:[%s9 + $0x10] sm:$0xff] %vm889, %v617
    %893 = vst.msk [vmem:[%s9 + $0x18] sm:$0xff] %vm889, %v618
    %894 = vst.msk [vmem:[%s9 + $0x20] sm:$0xff] %vm889, %v619
    %895 = vst.msk [vmem:[%s9 + $0x28] sm:$0xff] %vm889, %v620
    %896 = vst.msk [vmem:[%s9 + $0x30] sm:$0xff] %vm889, %v621
    %897 = vst.msk [vmem:[%s9 + $0x38] sm:$0xff] %vm889, %v622
    %s898 = scalar_lea.vmem %s9, 64
    %899 = vst.msk [vmem:[%s898] sm:$0xff] %vm889, %v827
    %900 = vst.msk [vmem:[%s898 + $0x8] sm:$0xff] %vm889, %v832
    %901 = vst.msk [vmem:[%s898 + $0x10] sm:$0xff] %vm889, %v837
    %902 = vst.msk [vmem:[%s898 + $0x18] sm:$0xff] %vm889, %v842
    %903 = vst.msk [vmem:[%s898 + $0x20] sm:$0xff] %vm889, %v847
    %904 = vst.msk [vmem:[%s898 + $0x28] sm:$0xff] %vm889, %v852
    %905 = vst.msk [vmem:[%s898 + $0x30] sm:$0xff] %vm889, %v857
    %906 = vst.msk [vmem:[%s898 + $0x38] sm:$0xff] %vm889, %v862
    %s907 = scalar_lea.vmem %s9, 128
    %908 = vst.msk [vmem:[%s907] sm:$0xff] %vm889, %v722
    %909 = vst.msk [vmem:[%s907 + $0x8] sm:$0xff] %vm889, %v727
    %910 = vst.msk [vmem:[%s907 + $0x10] sm:$0xff] %vm889, %v732
    %911 = vst.msk [vmem:[%s907 + $0x18] sm:$0xff] %vm889, %v737
    %912 = vst.msk [vmem:[%s907 + $0x20] sm:$0xff] %vm889, %v742
    %913 = vst.msk [vmem:[%s907 + $0x28] sm:$0xff] %vm889, %v747
    %914 = vst.msk [vmem:[%s907 + $0x30] sm:$0xff] %vm889, %v752
    %915 = vst.msk [vmem:[%s907 + $0x38] sm:$0xff] %vm889, %v757
    %s916 = scalar_lea.vmem %s9, 192
    %917 = vst.msk [vmem:[%s916] sm:$0xff] %vm889, %v881
    %918 = vst.msk [vmem:[%s916 + $0x8] sm:$0xff] %vm889, %v882
    %919 = vst.msk [vmem:[%s916 + $0x10] sm:$0xff] %vm889, %v883
    %920 = vst.msk [vmem:[%s916 + $0x18] sm:$0xff] %vm889, %v884
    %921 = vst.msk [vmem:[%s916 + $0x20] sm:$0xff] %vm889, %v885
    %922 = vst.msk [vmem:[%s916 + $0x28] sm:$0xff] %vm889, %v886
    %923 = vst.msk [vmem:[%s916 + $0x30] sm:$0xff] %vm889, %v887
    %924 = vst.msk [vmem:[%s916 + $0x38] sm:$0xff] %vm889, %v888
    %925 = vst [vmem:[#allocation2] sm:$0xff] %v269
    %926 = vst [vmem:[#allocation2 + $0x8] sm:$0xff] %v270
    %927 = vst [vmem:[#allocation2 + $0x10] sm:$0xff] %v271
    %928 = vst [vmem:[#allocation2 + $0x18] sm:$0xff] %v272
    %929 = vst [vmem:[#allocation2 + $0x20] sm:$0xff] %v273
    %930 = vst [vmem:[#allocation2 + $0x28] sm:$0xff] %v274
    %931 = vst [vmem:[#allocation2 + $0x30] sm:$0xff] %v275
    %932 = vst [vmem:[#allocation2 + $0x38] sm:$0xff] %v276
    %v933 = vadd.f32 %v360, %v51
    %v934 = vadd.f32 %v365, %v51
    %v935 = vadd.f32 %v370, %v51
    %v936 = vadd.f32 %v375, %v51
    %v937 = vadd.f32 %v380, %v51
    %v938 = vadd.f32 %v385, %v51
    %v939 = vadd.f32 %v390, %v51
    %v940 = vadd.f32 %v395, %v51
    %941 = vst.msk [vmem:[#allocation4] sm:$0xff] %vm75, %v933
    %942 = vst.msk [vmem:[#allocation4 + $0x8] sm:$0xff] %vm75, %v934
    %943 = vst.msk [vmem:[#allocation4 + $0x10] sm:$0xff] %vm75, %v935
    %944 = vst.msk [vmem:[#allocation4 + $0x18] sm:$0xff] %vm75, %v936
    %945 = vst.msk [vmem:[#allocation4 + $0x20] sm:$0xff] %vm75, %v937
    %946 = vst.msk [vmem:[#allocation4 + $0x28] sm:$0xff] %vm75, %v938
    %947 = vst.msk [vmem:[#allocation4 + $0x30] sm:$0xff] %vm75, %v939
    %948 = vst.msk [vmem:[#allocation4 + $0x38] sm:$0xff] %vm75, %v940
    // Predicated region
    $region38: #{tpu_custom_call.1} parent=1 // pred_check
      _
    $region39: #{tpu_custom_call.1} parent=1 // pred_check_branch
      %950 = sbr.rel (0) target = $region41
    $region40: #{tpu_custom_call.1} parent=1 // pred_region
      _
    $region41: #{tpu_custom_call.1} parent=1 // pred_fallthru
      _
    // Predicated region
    $region42: #{tpu_custom_call.1} parent=1 // pred_check
      _
    $region43: #{tpu_custom_call.1} parent=1 // pred_check_branch
      %952 = sbr.rel (0) target = $region45
    $region44: #{tpu_custom_call.1} parent=1 // pred_region
      %s954 = ssub.s32 1024, 1024
      %955 = vsyncadd [#allocation3], %s954
      %s956 = sshll.u32 [#allocation2], 4
      %s957 = int_to_ptr.vmem [resolvable:$true] %s956
      %962 = dma.vmem_to_hbm [thread:$0]  %s957, 1024, %s10, [#allocation3], 128, 128, 8
    $region45: #{tpu_custom_call.1} parent=1 // pred_fallthru
      _
    // Predicated region
    $region46: #{tpu_custom_call.1} parent=1 // pred_check
      _
    $region47: #{tpu_custom_call.1} parent=1 // pred_check_branch
      %964 = sbr.rel (0) target = $region49
    $region48: #{tpu_custom_call.1} parent=1 // pred_region
      %s966 = ssub.s32 1024, 1024
      %967 = vsyncadd [#allocation5], %s966
      %s968 = sshll.u32 [#allocation4], 4
      %s969 = int_to_ptr.vmem [resolvable:$true] %s968
      %974 = dma.vmem_to_hbm [thread:$0]  %s969, 1024, %s11, [#allocation5], 128, 128, 8
    $region49: #{tpu_custom_call.1} parent=1 // pred_fallthru
      _
    // Predicated region
    $region50: #{tpu_custom_call.1} parent=1 // pred_check
      _
    $region51: #{tpu_custom_call.1} parent=1 // pred_check_branch
      %976 = sbr.rel (0) target = $region53
    $region52: #{tpu_custom_call.1} parent=1 // pred_region
      _
    $region53: #{tpu_custom_call.1} parent=1 // pred_fallthru
      _
    // Predicated region
    $region54: #{tpu_custom_call.1} parent=1 // pred_check
      _
    $region55: #{tpu_custom_call.1} parent=1 // pred_check_branch
      %978 = sbr.rel (0) target = $region57
    $region56: #{tpu_custom_call.1} parent=1 // pred_region
      %979 = dma.done [#allocation3], 1024
    $region57: #{tpu_custom_call.1} parent=1 // pred_fallthru
      _
    // Predicated region
    $region58: #{tpu_custom_call.1} parent=1 // pred_check
      _
    $region59: #{tpu_custom_call.1} parent=1 // pred_check_branch
      %981 = sbr.rel (0) target = $region61
    $region60: #{tpu_custom_call.1} parent=1 // pred_region
      %982 = dma.done [#allocation5], 1024
    $region61: #{tpu_custom_call.1} parent=1 // pred_fallthru
      _
    %983 = vsyncpa [#allocation3], 1
    %984 = vsyncpa [#allocation5], 1

</llo_original>
